<compile_context>
chip_gen: v7x
topology: tpu7x:2x2x1
jax: 0.10.0
libtpu: 0.0.40
codegen_flags: <defaults>
</compile_context>

<pallas_src>
import functools

import numpy as np

import jax
import jax.numpy as jnp
from jax.experimental import pallas as pl
from jax.experimental.pallas import tpu as pltpu


def _round_up(x, m):
    return ((x + m - 1) // m) * m


def _embed_kernel(x_ref, w_ref, b_ref, out_ref):
    """One lane-dense (M_TILE, C_out_pad) output tile of conv1d + bias + ReLU.

    x_ref  : (M_TILE, K*C_in)     bf16 im2col rows for this tile (windowed)
    w_ref  : (K*C_in, C_out_pad)  bf16 weights   (VMEM resident, 1 buffer)
    b_ref  : (1, C_out_pad)       f32 bias       (VMEM resident, 1 buffer)
    out_ref: (M_TILE, C_out_pad)  f32
    """
    acc = jnp.dot(x_ref[...], w_ref[...], preferred_element_type=jnp.float32)
    acc = acc + b_ref[...]
    out_ref[...] = jnp.maximum(acc, 0.0).astype(out_ref.dtype)


def embedding_forward(x, weight, bias, *, kernel_size, stride, padding,
                      m_tile_cap=1024, compute_dtype=jnp.bfloat16):
    """x: (B, C_in, L).  weight: (C_out, C_in, K).  bias: (C_out,).

    Returns (B, L_out, C_out) = ReLU(conv1d(x)).permute(0, 2, 1).
    """
    B, C_in, L = x.shape
    C_out = weight.shape[0]
    K = kernel_size
    assert stride >= 1, "kernel_size - overlap must be >= 1"
    L_out = (L + 2 * padding - K) // stride + 1
    assert L_out >= 1

    LANES = 128
    C_out_pad = _round_up(C_out, LANES)
    KC = K * C_in

    assert m_tile_cap % 8 == 0
    M_TILE = min(m_tile_cap, _round_up(L_out, 8))
    M_seg = _round_up(L_out, M_TILE)
    # Load-bearing invariants for the BlockSpecs below.
    assert M_seg % M_TILE == 0 and M_TILE % 8 == 0 and C_out_pad % LANES == 0

    # ---- layout-only glue: channel-minor im2col, bf16, fused by XLA ----
    x_t = jnp.transpose(x, (0, 2, 1)).astype(compute_dtype)       # (B, L, C_in)
    l_need = (L_out - 1) * stride + K          # rightmost padded index + 1
    pad_right = max(0, l_need - L - padding)
    x_t = jnp.pad(x_t, ((0, 0), (padding, pad_right), (0, 0)))
    # patches[b, l, k*C_in + ci] = x_padded[b, l*stride + k, ci]
    taps = [x_t[:, k:k + (L_out - 1) * stride + 1:stride, :] for k in range(K)]
    patches = jnp.stack(taps, axis=2).reshape(B, L_out, KC)
    patches = jnp.pad(patches, ((0, 0), (0, M_seg - L_out), (0, 0)))

    # Weight column j = k*C_in + ci  <->  W[co, ci, k]; pad lanes to 128.
    w_mat = jnp.transpose(weight, (2, 1, 0)).reshape(KC, C_out)
    w_mat = jnp.pad(w_mat, ((0, 0), (0, C_out_pad - C_out))).astype(compute_dtype)
    b_mat = jnp.pad(bias.astype(jnp.float32).reshape(1, C_out),
                    ((0, 0), (0, C_out_pad - C_out)))

    grid = (B, M_seg // M_TILE)

    bytes_el = np.dtype(compute_dtype).itemsize
    cost = pl.CostEstimate(
        flops=2 * B * M_seg * KC * C_out_pad,
        transcendentals=0,
        bytes_accessed=(B * M_seg * KC * bytes_el
                        + KC * C_out_pad * bytes_el
                        + C_out_pad * 4
                        + B * M_seg * C_out_pad * 4),
    )

    out = pl.pallas_call(
        _embed_kernel,
        out_shape=jax.ShapeDtypeStruct((B, M_seg, C_out_pad), jnp.float32),
        grid_spec=pltpu.PrefetchScalarGridSpec(
            num_scalar_prefetch=0,
            grid=grid,
            in_specs=[
                # Windowed per grid step -> auto double-buffered DMA pipeline.
                pl.BlockSpec((None, M_TILE, KC), lambda b, m: (b, m, 0)),
                # Constant across the grid -> single buffer (no 2x footprint).
                pl.BlockSpec((KC, C_out_pad), lambda b, m: (0, 0),
                             pipeline_mode=pl.Buffered(1)),
                pl.BlockSpec((1, C_out_pad), lambda b, m: (0, 0),
                             pipeline_mode=pl.Buffered(1)),
            ],
            out_specs=pl.BlockSpec((None, M_TILE, C_out_pad),
                                   lambda b, m: (b, m, 0)),
        ),
        compiler_params=pltpu.CompilerParams(
            dimension_semantics=("parallel", "parallel"),
            vmem_limit_bytes=32 * 1024 * 1024),
        cost_estimate=cost,
    )(patches, w_mat, b_mat)

    # Only remaining post-processing: strip row / lane padding.
    return out[:, :L_out, :C_out]


def reference_forward(x, weight, bias, *, kernel_size, stride, padding):
    """Pure-JAX reference (lax conv) for sanity checking."""
    y = jax.lax.conv_general_dilated(
        x.astype(jnp.float32),
        weight.astype(jnp.float32),
        window_strides=(stride,),
        padding=[(padding, padding)],
        dimension_numbers=("NCH", "OIH", "NCH"),
    )
    y = y + bias.reshape(1, -1, 1).astype(jnp.float32)
    y = jnp.maximum(y, 0.0)
    return jnp.transpose(y, (0, 2, 1))


if __name__ == "__main__":
    # Module hyper-params (small, consistent with the module's structure).
    input_channel = 4
    embedding_c = 32
    kernel_size = 3
    overlap = 1
    padding = 1
    stride = kernel_size - overlap          # 2

    B, L = 2, 16

    key = jax.random.PRNGKey(0)
    kx, kw, kb = jax.random.split(key, 3)
    x = jax.random.normal(kx, (B, input_channel, L), dtype=jnp.float32)
    fan_in = input_channel * kernel_size
    bound = 1.0 / (fan_in ** 0.5)
    weight = jax.random.uniform(kw, (embedding_c, input_channel, kernel_size),
                                minval=-bound, maxval=bound, dtype=jnp.float32)
    bias = jax.random.uniform(kb, (embedding_c,),
                              minval=-bound, maxval=bound, dtype=jnp.float32)

    fwd = jax.jit(functools.partial(
        embedding_forward, kernel_size=kernel_size, stride=stride,
        padding=padding))
    y = fwd(x, weight, bias)
    jax.block_until_ready(y)

    # The kernel uses bf16 MXU operands with f32 accumulation, so compare
    # against an f32 reference evaluated on the bf16-rounded operands
    # (products are then exact in both paths; only summation order differs).
    x_q = x.astype(jnp.bfloat16).astype(jnp.float32)
    w_q = weight.astype(jnp.bfloat16).astype(jnp.float32)
    y_ref = reference_forward(x_q, w_q, bias, kernel_size=kernel_size,
                              stride=stride, padding=padding)

    L_out = (L + 2 * padding - kernel_size) // stride + 1
    assert y.shape == (B, L_out, embedding_c), y.shape
    assert jnp.allclose(y, y_ref, atol=1e-4, rtol=1e-4), (
        float(jnp.max(jnp.abs(y - y_ref))))

    print("KERNEL_OK")
</pallas_src>

<mosaic_0001>
module attributes {stable_mosaic.version = 11 : i64} {
  func.func @_embed_kernel(%arg0: i32, %arg1: i32, %arg2: memref<1x8x12xbf16, #tpu.memory_space<vmem>>, %arg3: memref<12x128xbf16, #tpu.memory_space<vmem>>, %arg4: memref<1x128xf32, #tpu.memory_space<vmem>>, %arg5: memref<1x8x128xf32, #tpu.memory_space<vmem>>) attributes {dimension_semantics = [#tpu.dimension_semantics<parallel>, #tpu.dimension_semantics<parallel>], iteration_bounds = array<i64: 2, 1>, scalar_prefetch = 0 : i64, scratch_operands = 0 : i64, tpu.core_type = #tpu.core_type<tc>, window_params = [{transform_indices = @transform_0, window_bounds = array<i64: 1, 8, 12>}, {pipeline_mode = #tpu.pipeline_mode<synchronous>, transform_indices = @transform_1, window_bounds = array<i64: 12, 128>}, {pipeline_mode = #tpu.pipeline_mode<synchronous>, transform_indices = @transform_2, window_bounds = array<i64: 1, 128>}, {transform_indices = @transform_3, window_bounds = array<i64: 1, 8, 128>}]} {
    %c0 = arith.constant 0 : index
    %c0_0 = arith.constant 0 : index
    %c0_1 = arith.constant 0 : index
    %0 = vector.load %arg2[%c0, %c0_0, %c0_1] : memref<1x8x12xbf16, #tpu.memory_space<vmem>>, vector<1x8x12xbf16>
    %1 = vector.shape_cast %0 : vector<1x8x12xbf16> to vector<8x12xbf16>
    %c0_2 = arith.constant 0 : index
    %c0_3 = arith.constant 0 : index
    %2 = vector.load %arg3[%c0_2, %c0_3] : memref<12x128xbf16, #tpu.memory_space<vmem>>, vector<12x128xbf16>
    %cst = arith.constant dense<0.000000e+00> : vector<8x128xf32>
    %3 = tpu.matmul %1, %2, %cst {dimension_numbers = #tpu.dot_dimension_numbers<[1], [0], [0], [1], [0, 0, 1, 1], [], []>} : vector<8x12xbf16>, vector<12x128xbf16>, vector<8x128xf32> -> vector<8x128xf32>
    %c0_4 = arith.constant 0 : index
    %c0_5 = arith.constant 0 : index
    %4 = vector.load %arg4[%c0_4, %c0_5] : memref<1x128xf32, #tpu.memory_space<vmem>>, vector<1x128xf32>
    %5 = vector.broadcast %4 : vector<1x128xf32> to vector<8x128xf32>
    %6 = arith.addf %3, %5 : vector<8x128xf32>
    %cst_6 = arith.constant 0.000000e+00 : f32
    %7 = vector.broadcast %cst_6 : f32 to vector<8x128xf32>
    %8 = arith.maximumf %6, %7 : vector<8x128xf32>
    %c0_7 = arith.constant 0 : index
    %c0_8 = arith.constant 0 : index
    %c0_9 = arith.constant 0 : index
    %9 = vector.load %arg5[%c0_7, %c0_8, %c0_9] : memref<1x8x128xf32, #tpu.memory_space<vmem>>, vector<1x8x128xf32>
    %10 = vector.shape_cast %9 : vector<1x8x128xf32> to vector<8x128xf32>
    %11 = vector.shape_cast %8 : vector<8x128xf32> to vector<1x8x128xf32>
    tpu.vector_store %arg5[%c0_7, %c0_8, %c0_9], %11 {strides = array<i32>} : memref<1x8x128xf32, #tpu.memory_space<vmem>>, vector<1x8x128xf32>,
    return
  }
  func.func @transform_0(%arg0: i32, %arg1: i32) -> (i32, i32, i32) {
    %c0_i32 = arith.constant 0 : i32
    %c0_i32_0 = arith.constant 0 : i32
    return %arg0, %arg1, %c0_i32 : i32, i32, i32
  }
  func.func @transform_1(%arg0: i32, %arg1: i32) -> (i32, i32) {
    %c0_i32 = arith.constant 0 : i32
    %c0_i32_0 = arith.constant 0 : i32
    %c0_i32_1 = arith.constant 0 : i32
    return %c0_i32, %c0_i32_0 : i32, i32
  }
  func.func @transform_2(%arg0: i32, %arg1: i32) -> (i32, i32) {
    %c0_i32 = arith.constant 0 : i32
    %c0_i32_0 = arith.constant 0 : i32
    %c0_i32_1 = arith.constant 0 : i32
    return %c0_i32, %c0_i32_0 : i32, i32
  }
  func.func @transform_3(%arg0: i32, %arg1: i32) -> (i32, i32, i32) {
    %c0_i32 = arith.constant 0 : i32
    %c0_i32_0 = arith.constant 0 : i32
    return %arg0, %arg1, %c0_i32 : i32, i32, i32
  }
}

</mosaic_0001>

<llo_original>
// kernel: embedding_forward.1
$region0: #{embedding_forward.1}
  #allocation0 [shape = 'u32[]', space=smem, size = 0x4, offset = 0x4, fixed_abs, tag = 'smem constant byte address 0x4 - core index']
  #allocation1 [shape = 'u32[144,128]{1,0:T(1,128)}', space=vmem, size = 0x12000, scoped, tag = 'internal scratch']
  %s0 = inlined_call_operand.vmem [shape: bf16[2,8,12], index: 0, kind: input, shape index: {}]
  %s1 = inlined_call_operand.vmem [shape: bf16[12,128], index: 1, kind: input, shape index: {}]
  %s2 = inlined_call_operand.vmem [shape: f32[1,128], index: 2, kind: input, shape index: {}]
  %s3 = inlined_call_operand.hbm [shape: f32[2,8,128], index: 3, kind: output, shape index: {}]
  %s4 = sld [smem:[#allocation0]]
  $region45: #{embedding_forward.1} parent=0
    _
  %s6 = ssub.s32 1, %s4
  %s7 = scalar_select 0, %s6, %s4
  $region1: #{embedding_forward.1} parent=0
    #allocation2 [shape = 'u8[8192]{0}', space=vmem, size = 0x2000, scoped, tag = 'output window, operand 0']
    #allocation3 [shape = 's32[2]{0}', space=sflag, size = 0x8, scoped, tag = 'scoped memory for embedding_forward.1']
    %8 = vsyncpa [#allocation3], 0
    %s9 = scalar_lea.sflag [#allocation3], 1
    %10 = vsyncpa %s9, 0
    loop: start=0, step=1, limit=4
    $region2: #{embedding_forward.1} parent=1 // loop_pre_header
      _
    $region3: #{embedding_forward.1} parent=1 // loop_header
      %s12 = sphi 0, %s16
      %p13 = scmp.ge.s32.totalorder %s12, 4
      %s19 = sphi 0, %s31
      %s20 = sphi 0, %s27
      %s21 = sphi 0, %s19
      %s22 = sphi 0, %s20
      %s23 = sphi 0, %s21
      %s24 = sphi 0, %s22
      %s36 = sphi 0, %s38
      %s39 = sphi 0, %s36
      %s40 = sphi 0, %s39
      %s56 = sphi 0, %s40
      %s60 = sphi 0, %s60
      %s62 = sphi 0, %s60
      %s63 = sphi 0, %s62
      %s77 = sphi 0, %s63
      %s81 = sphi 0, %s81
      %s83 = sphi 0, %s81
      %s84 = sphi 0, %s83
      %s98 = sphi 0, %s84
      %s106 = sphi 0, %s108
      %s109 = sphi 0, %s106
      %s110 = sphi 0, %s109
      %s126 = sphi 0, %s110
    $region4: #{embedding_forward.1} parent=1 // loop_header_branch
      %15 = sbr.rel (%p13) target = $region8
    $region5: #{embedding_forward.1} parent=1 // loop_body
      %s17 = ssub.s32 %s12, 1
      %s18 = ssub.s32 %s12, 2
      %s25 = sadd.s32 1, %s20
      %p26 = scmp.ge.s32.totalorder %s25, 1
      %s27 = scalar_select %p26, 0, %s25
      %s28 = sadd.s32 1, %s19
      %s29 = scalar_select %p26, %s28, %s19
      %p30 = scmp.ge.s32.totalorder %s29, 2
      %s31 = scalar_select %p30, 0, %s29
      %s32 = ssub.s32 %s19, %s31
      %s33 = ssub.s32 %s20, %s27
      %s34 = sor.u32 %s32, %s33
      %p35 = scmp.eq.s32.totalorder %s34, 0
      %s37 = sadd.s32 %s36, 1
      %s38 = scalar_select %p35, %s36, %s37
      %p41 = pneg %p35
      %p42 = scmp.eq.s32.totalorder %s12, 1
      %p43 = por %p41, %p42
      %p44 = scmp.ne.s32.totalorder %s36, %s39
      %p45 = scmp.eq.s32.totalorder %s12, 0
      %p46 = por %p44, %p45
      %p47 = scmp.ne.s32.totalorder %s36, %s39
      %p48 = scmp.eq.s32.totalorder %s17, 1
      %p49 = por %p47, %p48
      %p50 = scmp.ne.s32.totalorder %s39, %s40
      %p51 = scmp.eq.s32.totalorder %s17, 0
      %p52 = por %p50, %p51
      %p53 = scmp.ne.s32.totalorder %s39, %s40
      %p54 = scmp.eq.s32.totalorder %s18, 1
      %p55 = por %p53, %p54
      %p57 = scmp.ne.s32.totalorder %s40, %s56
      %p58 = scmp.eq.s32.totalorder %s18, 0
      %p59 = por %p57, %p58
      %s61 = sadd.s32 %s60, 1
      %p64 = scmp.eq.s32.totalorder %s12, 1
      %p65 = scmp.ne.s32.totalorder %s60, %s62
      %p66 = scmp.eq.s32.totalorder %s12, 0
      %p67 = por %p65, %p66
      %p68 = scmp.ne.s32.totalorder %s60, %s62
      %p69 = scmp.eq.s32.totalorder %s17, 1
      %p70 = por %p68, %p69
      %p71 = scmp.ne.s32.totalorder %s62, %s63
      %p72 = scmp.eq.s32.totalorder %s17, 0
      %p73 = por %p71, %p72
      %p74 = scmp.ne.s32.totalorder %s62, %s63
      %p75 = scmp.eq.s32.totalorder %s18, 1
      %p76 = por %p74, %p75
      %p78 = scmp.ne.s32.totalorder %s63, %s77
      %p79 = scmp.eq.s32.totalorder %s18, 0
      %p80 = por %p78, %p79
      %s82 = sadd.s32 %s81, 1
      %p85 = scmp.eq.s32.totalorder %s12, 1
      %p86 = scmp.ne.s32.totalorder %s81, %s83
      %p87 = scmp.eq.s32.totalorder %s12, 0
      %p88 = por %p86, %p87
      %p89 = scmp.ne.s32.totalorder %s81, %s83
      %p90 = scmp.eq.s32.totalorder %s17, 1
      %p91 = por %p89, %p90
      %p92 = scmp.ne.s32.totalorder %s83, %s84
      %p93 = scmp.eq.s32.totalorder %s17, 0
      %p94 = por %p92, %p93
      %p95 = scmp.ne.s32.totalorder %s83, %s84
      %p96 = scmp.eq.s32.totalorder %s18, 1
      %p97 = por %p95, %p96
      %p99 = scmp.ne.s32.totalorder %s84, %s98
      %p100 = scmp.eq.s32.totalorder %s18, 0
      %p101 = por %p99, %p100
      %s102 = ssub.s32 %s19, %s31
      %s103 = ssub.s32 %s20, %s27
      %s104 = sor.u32 %s102, %s103
      %p105 = scmp.eq.s32.totalorder %s104, 0
      %s107 = sadd.s32 %s106, 1
      %s108 = scalar_select %p105, %s106, %s107
      %p111 = pneg %p105
      %p112 = scmp.eq.s32.totalorder %s12, 1
      %p113 = por %p111, %p112
      %p114 = scmp.ne.s32.totalorder %s106, %s109
      %p115 = scmp.eq.s32.totalorder %s12, 0
      %p116 = por %p114, %p115
      %p117 = scmp.ne.s32.totalorder %s106, %s109
      %p118 = scmp.eq.s32.totalorder %s17, 1
      %p119 = por %p117, %p118
      %p120 = scmp.ne.s32.totalorder %s109, %s110
      %p121 = scmp.eq.s32.totalorder %s17, 0
      %p122 = por %p120, %p121
      %p123 = scmp.ne.s32.totalorder %s109, %s110
      %p124 = scmp.eq.s32.totalorder %s18, 1
      %p125 = por %p123, %p124
      %p127 = scmp.ne.s32.totalorder %s110, %s126
      %p128 = scmp.eq.s32.totalorder %s18, 0
      %p129 = por %p127, %p128
      %p130 = scmp.le.s32.totalorder 1, %s12
      %p131 = scmp.lt.s32.totalorder %s12, 3
      %p132 = pnand %p130, %p131
      %p133 = pneg %p132
      // Predicated region
      $region9: #{embedding_forward.1} parent=5 // pred_check
        _
      $region10: #{embedding_forward.1} parent=5 // pred_check_branch
        %135 = sbr.rel (%p132) target = $region12
      $region11: #{embedding_forward.1} parent=5 // pred_region
        %s136 = ssub.s32 %s12, 1
        // Predicated region
        $region13: #{embedding_forward.1} parent=11 // pred_check
          %p137 = pneg %p73
        $region14: #{embedding_forward.1} parent=11 // pred_check_branch
          %139 = sbr.rel (%p137) target = $region16
        $region15: #{embedding_forward.1} parent=11 // pred_region
          _
        $region16: #{embedding_forward.1} parent=11 // pred_fallthru
          _
        // Predicated region
        $region17: #{embedding_forward.1} parent=11 // pred_check
          %p140 = pneg %p94
        $region18: #{embedding_forward.1} parent=11 // pred_check_branch
          %142 = sbr.rel (%p140) target = $region20
        $region19: #{embedding_forward.1} parent=11 // pred_region
          _
        $region20: #{embedding_forward.1} parent=11 // pred_fallthru
          _
      $region12: #{embedding_forward.1} parent=5 // pred_fallthru
        _
      %p143 = scmp.lt.s32.totalorder %s12, 2
      // Predicated region
      $region21: #{embedding_forward.1} parent=5 // pred_check
        %p144 = pneg %p143
      $region22: #{embedding_forward.1} parent=5 // pred_check_branch
        %146 = sbr.rel (%p144) target = $region24
      $region23: #{embedding_forward.1} parent=5 // pred_region
        // Predicated region
        $region25: #{embedding_forward.1} parent=23 // pred_check
          %p147 = pneg %p46
        $region26: #{embedding_forward.1} parent=23 // pred_check_branch
          %149 = sbr.rel (%p147) target = $region28
        $region27: #{embedding_forward.1} parent=23 // pred_region
          %p150 = scmp.lt.s32.totalorder %s19, 1
          %s151 = scalar_select %p150, %s19, 1
          %p152 = scmp.lt.s32.totalorder %s20, 0
          %s153 = scalar_select %p152, %s20, 0
          %s154 = sadd.s32 %s153, %s151
          %s155 = smul.addr %s154, 4
          %s156 = scalar_lea.vmem %s0, %s155
        $region28: #{embedding_forward.1} parent=23 // pred_fallthru
          _
      $region24: #{embedding_forward.1} parent=5 // pred_fallthru
        _
      %p157 = scmp.le.s32.totalorder 1, %s12
      %p158 = scmp.lt.s32.totalorder %s12, 3
      %p159 = pnand %p157, %p158
      %p160 = pneg %p159
      // Predicated region
      $region29: #{embedding_forward.1} parent=5 // pred_check
        _
      $region30: #{embedding_forward.1} parent=5 // pred_check_branch
        %162 = sbr.rel (%p159) target = $region32
      $region31: #{embedding_forward.1} parent=5 // pred_region
        %s163 = ssub.s32 %s12, 1
        %p164 = scmp.lt.s32.totalorder %s21, 1
        %s165 = scalar_select %p164, %s21, 1
        %p166 = scmp.lt.s32.totalorder %s22, 0
        %s167 = scalar_select %p166, %s22, 0
        %s168 = sadd.s32 %s167, %s165
        %s169 = smul.addr %s168, 4
        %s170 = scalar_lea.vmem %s0, %s169
        %p171 = pneg %p52
        %p172 = pneg %p49
        %p173 = pneg %p73
        %p174 = pneg %p70
        %p175 = pneg %p94
        %p176 = pneg %p91
        %p177 = pneg %p122
        %p178 = pneg %p119
        %s179 = sand.u32 %s109, 1
        %s180 = scalar_lea.sflag [#allocation3], %s179
        %s181 = sand.u32 %s109, 1
        %s182 = smul.addr %s181, 8
        %s183 = scalar_lea.vmem [#allocation2], %s182
        %p184 = scmp.lt.s32.totalorder %s21, 1
        %s185 = scalar_select %p184, %s21, 1
        %p186 = scmp.lt.s32.totalorder %s22, 0
        %s187 = scalar_select %p186, %s22, 0
        %s188 = sadd.s32 %s187, %s185
        %s189 = smul.addr %s188, 4
        %s190 = scalar_lea.vmem %s0, %s189
        %v192 = vld [vmem:[%s190] sm:$0xf]
        %v193 = vld [vmem:[%s1] sm:$0xf]
        %v194 = vld [vmem:[%s1 + $0x4] sm:$0x3]
        %v195 = vld [vmem:[%s2] sm:$0x1]
        %v197 = vlaneseq
        %v198 = vshrl.u32 %v197, 7
        %v199 = vsub.s32 0, %v198
        %v200 = vrot.slane %v195, %v199
        %v204 = vunpack.c.l.b16 %v193
        %v205 = vunpack.c.l.b16 %v194
        %v206 = vpack.c.b16 %v205, %v204
        %vm207 = vcmask 97280
        %v209 = vsel %vm207, %v192, 0
        %vm211 = vcmask 1045504
        %v213 = vsel %vm211, %v206, 0
        %215 = vmatprep.subr.bf16.mxu0 0
        %216 = vmatpush1.bf16.msra.mxu0 %v213
        %217 = vmatprep.subr.bf16.mxu0 0
        %218 = vmatpush1.bf16.msra.mxu0 0
        %219 = vmatprep.subr.bf16.mxu0 0
        %220 = vmatpush1.bf16.msra.mxu0 0
        %221 = vmatprep.subr.bf16.mxu0 0
        %222 = vmatpush1.bf16.msra.mxu0 0
        %223 = vmatprep.subr.bf16.mxu0 0
        %224 = vmatpush1.bf16.msra.mxu0 0
        %225 = vmatprep.subr.bf16.mxu0 0
        %226 = vmatpush1.bf16.msra.mxu0 0
        %227 = vmatprep.subr.bf16.mxu0 0
        %228 = vmatpush1.bf16.msra.mxu0 0
        %229 = vmatprep.subr.bf16.mxu0 0
        %230 = vmatpush1.bf16.msra.mxu0 0
        %231 = vmatprep.subr.bf16.mxu0 0
        %232 = vmatpush1.bf16.msra.mxu0 0
        %233 = vmatprep.subr.bf16.mxu0 0
        %234 = vmatpush1.bf16.msra.mxu0 0
        %235 = vmatprep.subr.bf16.mxu0 0
        %236 = vmatpush1.bf16.msra.mxu0 0
        %237 = vmatprep.subr.bf16.mxu0 0
        %238 = vmatpush1.bf16.msra.mxu0 0
        %239 = vmatprep.subr.bf16.mxu0 0
        %240 = vmatpush1.bf16.msra.mxu0 0
        %241 = vmatprep.subr.bf16.mxu0 0
        %242 = vmatpush1.bf16.msra.mxu0 0
        %243 = vmatprep.subr.bf16.mxu0 0
        %244 = vmatpush1.bf16.msra.mxu0 0
        %245 = vmatprep.subr.bf16.mxu0 0
        %246 = vmatpush1.bf16.msra.mxu0 0
        %247 = vmatprep.mubr.bf16.mxu0 0
        %248 = vmatmul.mubr.bf16.gmra.mrb[0].mxu0 %v209
        %v249 = vpop.f32.mrb[0].mxu0
        %v250 = vadd.f32 %v200, %v249
        %v251 = vpop.f32.mrb[0].mxu0
        %v252 = vpop.f32.mrb[0].mxu0
        %v253 = vpop.f32.mrb[0].mxu0
        %254 = vdwg.mxu0
        %v255 = vmax.f32 %v250, 0.0
        %256 = vst [vmem:[%s183] sm:$0xff] %v255
        %s257 = sand.u32 %s109, 1
        %s258 = scalar_lea.sflag [#allocation3], %s257
        %s259 = sand.u32 %s109, 1
        %s260 = smul.addr %s259, 8
        %s261 = scalar_lea.vmem [#allocation2], %s260
        // Predicated region
        $region33: #{embedding_forward.1} parent=31 // pred_check
          %p262 = pneg %p119
        $region34: #{embedding_forward.1} parent=31 // pred_check_branch
          %264 = sbr.rel (%p262) target = $region36
        $region35: #{embedding_forward.1} parent=31 // pred_region
          %s266 = ssub.s32 128, 128
          %267 = vsyncadd %s258, %s266
          %s268 = sadd.s32 %s22, %s21
          %s269 = smul.addr %s268, 128
          %s270 = scalar_lea.hbm %s3, %s269
          %s272 = sshll.u32 %s261, 4
          %s273 = int_to_ptr.vmem [resolvable:$true] %s272
          %275 = dma.vmem_to_hbm [thread:$0]  %s273, 128, %s270, %s258
        $region36: #{embedding_forward.1} parent=31 // pred_fallthru
          _
      $region32: #{embedding_forward.1} parent=5 // pred_fallthru
        _
      %p276 = scmp.le.s32.totalorder 2, %s12
      // Predicated region
      $region37: #{embedding_forward.1} parent=5 // pred_check
        %p277 = pneg %p276
      $region38: #{embedding_forward.1} parent=5 // pred_check_branch
        %279 = sbr.rel (%p277) target = $region40
      $region39: #{embedding_forward.1} parent=5 // pred_region
        %s280 = ssub.s32 %s12, 2
        // Predicated region
        $region41: #{embedding_forward.1} parent=39 // pred_check
          %p281 = pneg %p125
        $region42: #{embedding_forward.1} parent=39 // pred_check_branch
          %283 = sbr.rel (%p281) target = $region44
        $region43: #{embedding_forward.1} parent=39 // pred_region
          %s284 = sand.u32 %s110, 1
          %s285 = scalar_lea.sflag [#allocation3], %s284
          %s286 = sand.u32 %s110, 1
          %s287 = smul.addr %s286, 8
          %s288 = scalar_lea.vmem [#allocation2], %s287
          %289 = dma.done %s285, 128
        $region44: #{embedding_forward.1} parent=39 // pred_fallthru
          _
      $region40: #{embedding_forward.1} parent=5 // pred_fallthru
        _
    $region6: #{embedding_forward.1} parent=1 // loop_footer
      %s16 = sadd.s32 1, %s12
    $region7: #{embedding_forward.1} parent=1 // loop_footer_branch
      %11 = sbr.rel target = $region3
    $region8: #{embedding_forward.1} parent=1 // loop_exit
      _
    %290 = vsyncpa [#allocation3], 1
    %s291 = scalar_lea.sflag [#allocation3], 1
    %292 = vsyncpa %s291, 1

</llo_original>
